<compile_context>
chip_gen: v5e
topology: v5e:2x2
jax: 0.10.0
libtpu: 0.0.40
codegen_flags: <defaults>
</compile_context>

<pallas_src>
import functools

import jax
import jax.numpy as jnp
from jax.experimental import pallas as pl
from jax.experimental.pallas import tpu as pltpu


def _round_up(x, m):
    return ((x + m - 1) // m) * m


# ----------------------------- kernels ---------------------------------------

def _fc_relu_kernel_fullk(x_ref, w_ref, b_ref, o_ref):
    # Whole reduction dim in one block: no scratch accumulator, single fused
    # matmul + bias + ReLU store.
    acc = jnp.dot(x_ref[...], w_ref[...], preferred_element_type=jnp.float32)
    out = acc + b_ref[...]
    o_ref[...] = jnp.maximum(out, 0.0).astype(o_ref.dtype)


def _fc_relu_kernel_acc(x_ref, w_ref, b_ref, o_ref, acc_ref):
    # K-split path: f32 VMEM accumulator, bias + ReLU epilogue on last K step.
    k = pl.program_id(2)

    @pl.when(k == 0)
    def _():
        acc_ref[...] = jnp.zeros_like(acc_ref)

    acc_ref[...] += jnp.dot(
        x_ref[...], w_ref[...], preferred_element_type=jnp.float32
    )

    @pl.when(k == pl.num_programs(2) - 1)
    def _():
        out = acc_ref[...] + b_ref[...]
        o_ref[...] = jnp.maximum(out, 0.0).astype(o_ref.dtype)


# ----------------------------- host-side call --------------------------------

@functools.partial(
    jax.jit, static_argnames=("tn", "tk", "tile_m", "use_bf16", "out_dim")
)
def _fc_relu_call(x, w, b, *, tn, tk, tile_m, use_bf16, out_dim):
    """x: [M, K] (unpadded); w: [Kp, Np] prepared; b: [1, Np] f32 prepared."""
    M, K = x.shape
    Kp, Np = w.shape
    out_dtype = x.dtype
    in_dtype = jnp.bfloat16 if use_bf16 else out_dtype

    # Sublane multiple: bf16 vregs pack 16 sublanes, f32 packs 8.
    m_align = 16 if use_bf16 else 8
    tm = _round_up(min(tile_m, _round_up(M, m_align)), m_align)
    Mp = _round_up(M, tm)

    # Only x is padded per call.  K padding is load-bearing (zero columns add
    # nothing to x @ W); padded M rows are sliced off below.
    if (Mp, Kp) != (M, K):
        x = jnp.pad(x, ((0, Mp - M), (0, Kp - K)))
    x = x.astype(in_dtype)

    grid_m, grid_n, grid_k = Mp // tm, Np // tn, Kp // tk

    in_bytes = jnp.dtype(in_dtype).itemsize
    out_bytes = jnp.dtype(out_dtype).itemsize
    cost = pl.CostEstimate(
        flops=2 * Mp * Np * Kp,
        transcendentals=0,
        bytes_accessed=(
            in_bytes * Mp * Kp * grid_n      # x re-fetched once per N tile
            + in_bytes * Kp * Np * grid_m    # W re-fetched once per M tile
            + out_bytes * Mp * Np
            + 4 * Np
        ),
    )

    # Double-buffered inputs/outputs (+ f32 accumulator if K is split).
    footprint = (
        2 * (tm * tk + tk * tn) * in_bytes
        + 2 * tm * tn * out_bytes
        + 2 * tn * 4
        + (tm * tn * 4 if grid_k > 1 else 0)
    )
    # Raise the scoped VMEM limit (v5e default 16 MiB) but stay safely under
    # v7x's 64 MiB physical VMEM per TensorCore.
    vmem_limit = int(min(max(32 << 20, 2 * footprint), 48 << 20))

    if grid_k == 1:
        out = pl.pallas_call(
            _fc_relu_kernel_fullk,
            out_shape=jax.ShapeDtypeStruct((Mp, Np), out_dtype),
            grid_spec=pltpu.PrefetchScalarGridSpec(
                num_scalar_prefetch=0,
                grid=(grid_m, grid_n),
                in_specs=[
                    pl.BlockSpec((tm, tk), lambda i, j: (i, 0)),
                    pl.BlockSpec((tk, tn), lambda i, j: (0, j)),
                    pl.BlockSpec((1, tn), lambda i, j: (0, j)),
                ],
                out_specs=pl.BlockSpec((tm, tn), lambda i, j: (i, j)),
            ),
            compiler_params=pltpu.CompilerParams(
                dimension_semantics=("parallel", "parallel"),
                vmem_limit_bytes=vmem_limit,
            ),
            cost_estimate=cost,
        )(x, w, b)
    else:
        out = pl.pallas_call(
            _fc_relu_kernel_acc,
            out_shape=jax.ShapeDtypeStruct((Mp, Np), out_dtype),
            grid_spec=pltpu.PrefetchScalarGridSpec(
                num_scalar_prefetch=0,
                grid=(grid_m, grid_n, grid_k),
                in_specs=[
                    pl.BlockSpec((tm, tk), lambda i, j, k: (i, k)),
                    pl.BlockSpec((tk, tn), lambda i, j, k: (k, j)),
                    pl.BlockSpec((1, tn), lambda i, j, k: (0, j)),
                ],
                out_specs=pl.BlockSpec((tm, tn), lambda i, j, k: (i, j)),
                scratch_shapes=[pltpu.VMEM((tm, tn), jnp.float32)],
            ),
            compiler_params=pltpu.CompilerParams(
                dimension_semantics=("parallel", "parallel", "arbitrary"),
                vmem_limit_bytes=vmem_limit,
            ),
            cost_estimate=cost,
        )(x, w, b)

    if (Mp, Np) != (M, out_dim):
        out = out[:M, :out_dim]
    return out


class FCReLUPallas:
    """Pallas TPU equivalent of FCReLU (nn.Linear + nn.ReLU).

    Parameter prep (transpose to [in_dim, out_dim], zero-pad K/N to lane-aligned
    tile multiples, bf16 cast) happens ONCE here; per call only x is padded.
    """

    def __init__(self, weight, bias, *, tile_m=512, tile_n=512, tile_k=1024,
                 use_bf16=True, split_n_for_megacore=True):
        # weight: [out_dim, in_dim] (PyTorch nn.Linear layout); bias: [out_dim].
        out_dim, in_dim = weight.shape
        assert bias.shape == (out_dim,)
        self.in_dim, self.out_dim = in_dim, out_dim
        self.use_bf16 = bool(use_bf16)
        self.tile_m = int(tile_m)

        w = jnp.asarray(weight).T  # [in_dim, out_dim], transposed once

        Np0 = _round_up(out_dim, 128)
        Kp0 = _round_up(in_dim, 128)

        tn = _round_up(min(tile_n, Np0), 128)
        # v7x has 2 TensorCores sharing the grid: keep >=2 parallel N tiles when
        # the split is exact so small-batch (single-M-tile) shapes use both TCs.
        if (split_n_for_megacore and tn == Np0 and Np0 >= 256
                and (Np0 // 2) % 128 == 0):
            tn = Np0 // 2
        tk = _round_up(min(tile_k, Kp0), 128)

        Np = _round_up(Np0, tn)
        Kp = _round_up(Kp0, tk)

        if (Kp, Np) != (in_dim, out_dim):
            w = jnp.pad(w, ((0, Kp - in_dim), (0, Np - out_dim)))
        b = jnp.asarray(bias)
        if Np != out_dim:
            b = jnp.pad(b, (0, Np - out_dim))

        param_dtype = jnp.bfloat16 if self.use_bf16 else w.dtype
        self.w = w.astype(param_dtype)                    # [Kp, Np]
        self.b = b.astype(jnp.float32).reshape(1, Np)     # f32 bias for epilogue
        self.tn, self.tk = tn, tk

    def __call__(self, x):
        return _fc_relu_call(
            x, self.w, self.b,
            tn=self.tn, tk=self.tk, tile_m=self.tile_m,
            use_bf16=self.use_bf16, out_dim=self.out_dim,
        )


# ----------------------------- demo / checks ---------------------------------

def _reference(x, w_t, b, use_bf16):
    # w_t: [in_dim, out_dim].  Match kernel math: bf16 inputs, f32 accumulation.
    if use_bf16:
        x = x.astype(jnp.bfloat16).astype(jnp.float32)
        w_t = w_t.astype(jnp.bfloat16).astype(jnp.float32)
    return jnp.maximum(x @ w_t + b, 0.0)


if __name__ == "__main__":
    # Small shapes consistent with the module: batch=8, in_dim=32, out_dim=64.
    batch, in_dim, out_dim = 8, 32, 64

    key = jax.random.PRNGKey(0)
    kx, kw, kb = jax.random.split(key, 3)

    x = jax.random.normal(kx, (batch, in_dim), dtype=jnp.float32)
    # nn.Linear-style init; weight in PyTorch layout [out_dim, in_dim].
    bound = 1.0 / jnp.sqrt(in_dim)
    weight = jax.random.uniform(kw, (out_dim, in_dim), dtype=jnp.float32,
                                minval=-bound, maxval=bound)
    bias = jax.random.uniform(kb, (out_dim,), dtype=jnp.float32,
                              minval=-bound, maxval=bound)

    # Default bf16 path (full-K fused kernel, 2-D grid).
    layer = FCReLUPallas(weight, bias)
    y = jax.block_until_ready(layer(x))
    y_ref = _reference(x, weight.T, bias, use_bf16=True)
    assert y.shape == (batch, out_dim)
    assert jnp.allclose(y, y_ref, atol=1e-3, rtol=1e-3)

    # f32 path sanity check.
    layer_f32 = FCReLUPallas(weight, bias, use_bf16=False)
    y32 = jax.block_until_ready(layer_f32(x))
    y32_ref = _reference(x, weight.T, bias, use_bf16=False)
    assert jnp.allclose(y32, y32_ref, atol=1e-5, rtol=1e-5)

    # Non-aligned, multi-tile shape exercising the K-split accumulator path.
    M2, K2, N2 = 300, 200, 384
    k2x, k2w, k2b = jax.random.split(jax.random.PRNGKey(1), 3)
    x2 = jax.random.normal(k2x, (M2, K2), dtype=jnp.float32)
    weight2 = jax.random.normal(k2w, (N2, K2), dtype=jnp.float32) * 0.05
    bias2 = jax.random.normal(k2b, (N2,), dtype=jnp.float32)

    layer2 = FCReLUPallas(weight2, bias2, tile_m=128, tile_n=128, tile_k=128)
    y2 = jax.block_until_ready(layer2(x2))
    y2_ref = _reference(x2, weight2.T, bias2, use_bf16=True)
    assert y2.shape == (M2, N2)
    assert jnp.allclose(y2, y2_ref, atol=2e-3, rtol=2e-3)

    print("KERNEL_OK")
</pallas_src>

<mosaic_0001>
module attributes {stable_mosaic.version = 11 : i64} {
  func.func @_fc_relu_kernel_fullk(%arg0: i32, %arg1: i32, %arg2: memref<16x128xbf16, #tpu.memory_space<vmem>>, %arg3: memref<128x128xbf16, #tpu.memory_space<vmem>>, %arg4: memref<1x128xf32, #tpu.memory_space<vmem>>, %arg5: memref<16x128xf32, #tpu.memory_space<vmem>>) attributes {dimension_semantics = [#tpu.dimension_semantics<parallel>, #tpu.dimension_semantics<parallel>], iteration_bounds = array<i64: 1, 1>, scalar_prefetch = 0 : i64, scratch_operands = 0 : i64, tpu.core_type = #tpu.core_type<tc>, window_params = [{transform_indices = @transform_0, window_bounds = array<i64: 16, 128>}, {transform_indices = @transform_1, window_bounds = array<i64: 128, 128>}, {transform_indices = @transform_2, window_bounds = array<i64: 1, 128>}, {transform_indices = @transform_3, window_bounds = array<i64: 16, 128>}]} {
    %c0 = arith.constant 0 : index
    %c0_0 = arith.constant 0 : index
    %0 = vector.load %arg2[%c0, %c0_0] : memref<16x128xbf16, #tpu.memory_space<vmem>>, vector<16x128xbf16>
    %c0_1 = arith.constant 0 : index
    %c0_2 = arith.constant 0 : index
    %1 = vector.load %arg3[%c0_1, %c0_2] : memref<128x128xbf16, #tpu.memory_space<vmem>>, vector<128x128xbf16>
    %cst = arith.constant dense<0.000000e+00> : vector<16x128xf32>
    %2 = tpu.matmul %0, %1, %cst {dimension_numbers = #tpu.dot_dimension_numbers<[1], [0], [0], [1], [0, 0, 1, 1], [], []>} : vector<16x128xbf16>, vector<128x128xbf16>, vector<16x128xf32> -> vector<16x128xf32>
    %c0_3 = arith.constant 0 : index
    %c0_4 = arith.constant 0 : index
    %3 = vector.load %arg4[%c0_3, %c0_4] : memref<1x128xf32, #tpu.memory_space<vmem>>, vector<1x128xf32>
    %4 = vector.broadcast %3 : vector<1x128xf32> to vector<16x128xf32>
    %5 = arith.addf %2, %4 : vector<16x128xf32>
    %cst_5 = arith.constant 0.000000e+00 : f32
    %6 = vector.broadcast %cst_5 : f32 to vector<16x128xf32>
    %7 = arith.maximumf %5, %6 : vector<16x128xf32>
    %c0_6 = arith.constant 0 : index
    %c0_7 = arith.constant 0 : index
    %8 = vector.load %arg5[%c0_6, %c0_7] : memref<16x128xf32, #tpu.memory_space<vmem>>, vector<16x128xf32>
    tpu.vector_store %arg5[%c0_6, %c0_7], %7 {strides = array<i32>} : memref<16x128xf32, #tpu.memory_space<vmem>>, vector<16x128xf32>,
    return
  }
  func.func @transform_0(%arg0: i32, %arg1: i32) -> (i32, i32) {
    %c0_i32 = arith.constant 0 : i32
    %c0_i32_0 = arith.constant 0 : i32
    return %arg0, %c0_i32 : i32, i32
  }
  func.func @transform_1(%arg0: i32, %arg1: i32) -> (i32, i32) {
    %c0_i32 = arith.constant 0 : i32
    %c0_i32_0 = arith.constant 0 : i32
    return %c0_i32, %arg1 : i32, i32
  }
  func.func @transform_2(%arg0: i32, %arg1: i32) -> (i32, i32) {
    %c0_i32 = arith.constant 0 : i32
    %c0_i32_0 = arith.constant 0 : i32
    return %c0_i32, %arg1 : i32, i32
  }
  func.func @transform_3(%arg0: i32, %arg1: i32) -> (i32, i32) {
    %c0_i32 = arith.constant 0 : i32
    return %arg0, %arg1 : i32, i32
  }
}

</mosaic_0001>

<llo_original>
// kernel: _fc_relu_call.1
$region0: #{_fc_relu_call.1}
  #allocation0 [shape = 'u32[]', space=smem, size = 0x4, offset = 0x4, fixed_abs, tag = 'smem constant byte address 0x4 - core index']
  #allocation1 [shape = 'u32[72,128]{1,0:T(1,128)}', space=vmem, size = 0x9000, scoped, tag = 'internal scratch']
  %s0 = inlined_call_operand.vmem [shape: bf16[16,128], index: 0, kind: input, shape index: {}]
  %s1 = inlined_call_operand.hbm [shape: bf16[128,128], index: 1, kind: input, shape index: {}]
  %s2 = inlined_call_operand.vmem [shape: f32[1,128], index: 2, kind: input, shape index: {}]
  %s3 = inlined_call_operand.vmem [shape: f32[16,128], index: 3, kind: output, shape index: {}]
  %s4 = sld [smem:[#allocation0]]
  $region26: #{_fc_relu_call.1} parent=0
    _
  %s6 = ssub.s32 1, %s4
  %s7 = scalar_select 0, %s6, %s4
  $region1: #{_fc_relu_call.1} parent=0
    #allocation2 [shape = 'u8[32768]{0}', space=vmem, size = 0x8000, scoped, tag = 'input window, operand 1, single buffered']
    #allocation3 [shape = 's32[1]{0}', space=sflag, size = 0x4, scoped, tag = 'scoped memory for _fc_relu_call.1']
    %8 = vsyncpa [#allocation3], 0
    // Predicated region
    $region2: #{_fc_relu_call.1} parent=1 // pred_check
      _
    $region3: #{_fc_relu_call.1} parent=1 // pred_check_branch
      %10 = sbr.rel (0) target = $region5
    $region4: #{_fc_relu_call.1} parent=1 // pred_region
      _
    $region5: #{_fc_relu_call.1} parent=1 // pred_fallthru
      _
    // Predicated region
    $region6: #{_fc_relu_call.1} parent=1 // pred_check
      _
    $region7: #{_fc_relu_call.1} parent=1 // pred_check_branch
      %12 = sbr.rel (0) target = $region9
    $region8: #{_fc_relu_call.1} parent=1 // pred_region
      %14 = vsyncadd [#allocation3], 0
      %s15 = sshll.u32 %s1, 4
      %s16 = int_to_ptr.hbm [resolvable:$true] %s15
      %s17 = sshll.u32 [#allocation2], 4
      %s18 = int_to_ptr.vmem [resolvable:$true] %s17
      %23 = dma.hbm_to_vmem [thread:$0]  %s16, 1024, %s18, [#allocation3], 64, 64, 4
    $region9: #{_fc_relu_call.1} parent=1 // pred_fallthru
      _
    // Predicated region
    $region10: #{_fc_relu_call.1} parent=1 // pred_check
      _
    $region11: #{_fc_relu_call.1} parent=1 // pred_check_branch
      %25 = sbr.rel (0) target = $region13
    $region12: #{_fc_relu_call.1} parent=1 // pred_region
      _
    $region13: #{_fc_relu_call.1} parent=1 // pred_fallthru
      _
    // Predicated region
    $region14: #{_fc_relu_call.1} parent=1 // pred_check
      _
    $region15: #{_fc_relu_call.1} parent=1 // pred_check_branch
      %27 = sbr.rel (0) target = $region17
    $region16: #{_fc_relu_call.1} parent=1 // pred_region
      %29 = dma.done [#allocation3], 1024
    $region17: #{_fc_relu_call.1} parent=1 // pred_fallthru
      _
    %v30 = vld [vmem:[%s0] sm:$0xf]
    %v31 = vld [vmem:[%s0 + $0x4] sm:$0xf]
    %v32 = vld [vmem:[#allocation2] sm:$0xf]
    %v33 = vld [vmem:[#allocation2 + $0x4] sm:$0xf]
    %v34 = vld [vmem:[#allocation2 + $0x8] sm:$0xf]
    %v35 = vld [vmem:[#allocation2 + $0xc] sm:$0xf]
    %v36 = vld [vmem:[#allocation2 + $0x10] sm:$0xf]
    %v37 = vld [vmem:[#allocation2 + $0x14] sm:$0xf]
    %v38 = vld [vmem:[#allocation2 + $0x18] sm:$0xf]
    %v39 = vld [vmem:[#allocation2 + $0x1c] sm:$0xf]
    %v40 = vld [vmem:[#allocation2 + $0x20] sm:$0xf]
    %v41 = vld [vmem:[#allocation2 + $0x24] sm:$0xf]
    %v42 = vld [vmem:[#allocation2 + $0x28] sm:$0xf]
    %v43 = vld [vmem:[#allocation2 + $0x2c] sm:$0xf]
    %v44 = vld [vmem:[#allocation2 + $0x30] sm:$0xf]
    %v45 = vld [vmem:[#allocation2 + $0x34] sm:$0xf]
    %v46 = vld [vmem:[#allocation2 + $0x38] sm:$0xf]
    %v47 = vld [vmem:[#allocation2 + $0x3c] sm:$0xf]
    %v48 = vld [vmem:[%s2] sm:$0x1]
    %v50 = vperm.slane %v48, 0
    %v54 = vunpack.c.l.b16 %v30
    %v55 = vunpack.c.l.b16 %v31
    %v56 = vpack.c.b16 %v55, %v54
    %v74 = vunpack.c.l.b16 %v32
    %v75 = vunpack.c.l.b16 %v33
    %v76 = vunpack.c.l.b16 %v34
    %v77 = vunpack.c.l.b16 %v35
    %v78 = vunpack.c.l.b16 %v36
    %v79 = vunpack.c.l.b16 %v37
    %v80 = vunpack.c.l.b16 %v38
    %v81 = vunpack.c.l.b16 %v39
    %v82 = vunpack.c.l.b16 %v40
    %v83 = vunpack.c.l.b16 %v41
    %v84 = vunpack.c.l.b16 %v42
    %v85 = vunpack.c.l.b16 %v43
    %v86 = vunpack.c.l.b16 %v44
    %v87 = vunpack.c.l.b16 %v45
    %v88 = vunpack.c.l.b16 %v46
    %v89 = vunpack.c.l.b16 %v47
    %v90 = vpack.c.b16 %v75, %v74
    %v91 = vpack.c.b16 %v77, %v76
    %v92 = vpack.c.b16 %v79, %v78
    %v93 = vpack.c.b16 %v81, %v80
    %v94 = vpack.c.b16 %v83, %v82
    %v95 = vpack.c.b16 %v85, %v84
    %v96 = vpack.c.b16 %v87, %v86
    %v97 = vpack.c.b16 %v89, %v88
    %106 = vmatpush.bf16.msra.mxu0 %v97
    %107 = vmatpush.bf16.msra.mxu0 %v96
    %108 = vmatpush.bf16.msra.mxu0 %v95
    %109 = vmatpush.bf16.msra.mxu0 %v94
    %110 = vmatpush.bf16.msra.mxu0 %v93
    %111 = vmatpush.bf16.msra.mxu0 %v92
    %112 = vmatpush.bf16.msra.mxu0 %v91
    %113 = vmatpush.bf16.msra.mxu0 %v90
    %114 = vmatmul.bf16.gmra.mxu0 %v56
    %v115 = vpop.f32.mrf.mxu0
    %v116 = vadd.f32 %v50, %v115
    %v117 = vpop.f32.mrf.mxu0
    %v118 = vadd.f32 %v50, %v117
    %119 = vdwg.mxu0
    %v120 = vmax.f32 %v116, 0.0
    %v121 = vmax.f32 %v118, 0.0
    %122 = vst [vmem:[%s3] sm:$0xff] %v120
    %123 = vst [vmem:[%s3 + $0x8] sm:$0xff] %v121
    // Predicated region
    $region18: #{_fc_relu_call.1} parent=1 // pred_check
      _
    $region19: #{_fc_relu_call.1} parent=1 // pred_check_branch
      %125 = sbr.rel (0) target = $region21
    $region20: #{_fc_relu_call.1} parent=1 // pred_region
      _
    $region21: #{_fc_relu_call.1} parent=1 // pred_fallthru
      _
    // Predicated region
    $region22: #{_fc_relu_call.1} parent=1 // pred_check
      _
    $region23: #{_fc_relu_call.1} parent=1 // pred_check_branch
      %127 = sbr.rel (0) target = $region25
    $region24: #{_fc_relu_call.1} parent=1 // pred_region
      _
    $region25: #{_fc_relu_call.1} parent=1 // pred_fallthru
      _
    %128 = vsyncpa [#allocation3], 1

</llo_original>
